<compile_context>
chip_gen: v5e
topology: v5e:2x2
jax: 0.10.0
libtpu: 0.0.40
codegen_flags: <defaults>
</compile_context>

<pallas_src>
import functools

import jax
import jax.numpy as jnp
from jax.experimental import pallas as pl
from jax.experimental.pallas import tpu as pltpu


# ---------------------------------------------------------------------------
# Pallas kernel: fused (word + position + token-type) sum + LayerNorm
# ---------------------------------------------------------------------------
def _emb_ln_kernel(w_ref, ids_ref, p_ref, tt_ref, g_ref, b_ref, o_ref, *,
                   eps, n_types):
    # w_ref   : (Bb, ts, H) bf16  gathered word embeddings
    # ids_ref : (Bb, ts, 1) int32 token-type ids
    # p_ref   : (ts, H)     bf16  position embeddings (shared across batch)
    # tt_ref  : (T, H)      bf16  full token-type table (tiny, resident)
    # g_ref   : (1, H)      f32   LayerNorm gamma
    # b_ref   : (1, H)      f32   LayerNorm beta
    x = (w_ref[...].astype(jnp.float32)
         + p_ref[...].astype(jnp.float32)[None, :, :])          # (Bb, ts, H)

    # Fused token-type embedding lookup: per-type select/accumulate on the VPU.
    ids = ids_ref[...]                                           # (Bb, ts, 1)
    tt = tt_ref[...].astype(jnp.float32)                         # (T, H)
    for t in range(n_types):                                     # static, tiny T
        x = x + (ids == t).astype(jnp.float32) * tt[t].reshape(1, 1, -1)

    # Single-pass LayerNorm statistics (f32 accumulation).
    s1 = jnp.mean(x, axis=-1, keepdims=True)
    s2 = jnp.mean(x * x, axis=-1, keepdims=True)
    inv = jax.lax.rsqrt(s2 - s1 * s1 + eps)                      # EUP slot
    y = (x - s1) * inv * g_ref[...][None, :, :] + b_ref[...][None, :, :]
    o_ref[...] = y.astype(o_ref.dtype)


# ---------------------------------------------------------------------------
# VMEM-budget-aware tile selection
# ---------------------------------------------------------------------------
def _pick_tiles(B, S, H, bytes_per_elem, target_block_bytes=1 << 20):
    """Pick (Bb, ts) so each streamed block is ~target_block_bytes, no padding."""
    # Sequence tile: full S if it fits, else the largest multiple-of-8 divisor.
    if S * H * bytes_per_elem <= target_block_bytes:
        ts = S
    else:
        ts = S  # TODO(synk): ragged S with no clean divisor -> single big block
        for cand in range(min(S, 2048), 7, -1):
            if (cand % 8 == 0 and S % cand == 0
                    and cand * H * bytes_per_elem <= target_block_bytes):
                ts = cand
                break
    # Batch tile: grow the block toward the target size.
    Bb = 1
    while (Bb * 2 <= B and B % (Bb * 2) == 0
           and (Bb * 2) * ts * H * bytes_per_elem <= target_block_bytes):
        Bb *= 2
    # Keep >= 2 parallel grid steps when possible (v7x has 2 TensorCores).
    if (S // ts) * (B // Bb) < 2 and Bb > 1:
        Bb //= 2
    return Bb, ts


# ---------------------------------------------------------------------------
# Forward (mirrors BertEmbeddings.forward; dropout = identity at inference)
# ---------------------------------------------------------------------------
def bert_embeddings_forward(params, input_ids, token_type_ids,
                            past_key_values_length=0, *, eps=1e-12,
                            out_dtype=jnp.bfloat16):
    B, S = input_ids.shape
    word_tab = params['word_embeddings']            # (V, H) bf16
    pos_tab = params['position_embeddings']         # (P, H) bf16
    tt_tab = params['token_type_embeddings']        # (T, H) bf16
    H = word_tab.shape[1]
    T = tt_tab.shape[0]

    # Word-embedding gather stays in XLA (bf16 stream -> half the HBM read).
    inputs_embeds = jnp.take(word_tab, input_ids, axis=0)        # (B, S, H) bf16
    # Absolute position ids are arange(past, past+S) -> contiguous slice.
    # NOTE: silently clamps if past + S > max_position_embeddings.
    pos_embeds = jax.lax.dynamic_slice_in_dim(
        pos_tab, past_key_values_length, S, axis=0)              # (S, H) bf16

    ids3 = token_type_ids.astype(jnp.int32).reshape(B, S, 1)
    gamma = params['ln_gamma'].reshape(1, H).astype(jnp.float32)
    beta = params['ln_beta'].reshape(1, H).astype(jnp.float32)

    in_bytes = jnp.dtype(inputs_embeds.dtype).itemsize
    out_bytes = jnp.dtype(out_dtype).itemsize
    Bb, ts = _pick_tiles(B, S, H, in_bytes)
    grid = (S // ts, B // Bb)      # batch innermost -> position block stays resident

    # VMEM estimate: double-buffered streamed blocks + small resident operands.
    blk = Bb * ts * H
    vmem_est = 2 * (blk * in_bytes + blk * out_bytes
                    + ts * H * in_bytes + Bb * ts * 4)
    vmem_est += T * H * in_bytes + 2 * H * 4
    cp_kwargs = dict(dimension_semantics=("parallel", "parallel"))
    if vmem_est > (12 << 20):      # only raise the scoped limit when needed
        cp_kwargs["vmem_limit_bytes"] = int(min(2 * vmem_est, 48 << 20))

    out = pl.pallas_call(
        functools.partial(_emb_ln_kernel, eps=eps, n_types=T),
        out_shape=jax.ShapeDtypeStruct((B, S, H), out_dtype),
        grid=grid,
        in_specs=[
            pl.BlockSpec((Bb, ts, H), lambda s, b: (b, s, 0)),   # word emb (bf16)
            pl.BlockSpec((Bb, ts, 1), lambda s, b: (b, s, 0)),   # token-type ids
            pl.BlockSpec((ts, H), lambda s, b: (s, 0)),          # pos emb (resident over b)
            pl.BlockSpec((T, H), lambda s, b: (0, 0)),           # token-type table (tiny)
            pl.BlockSpec((1, H), lambda s, b: (0, 0)),           # gamma
            pl.BlockSpec((1, H), lambda s, b: (0, 0)),           # beta
        ],
        out_specs=pl.BlockSpec((Bb, ts, H), lambda s, b: (b, s, 0)),
        compiler_params=pltpu.CompilerParams(**cp_kwargs),
    )(inputs_embeds, ids3, pos_embeds, tt_tab, gamma, beta)

    # TODO(synk): nn.Dropout(hidden_dropout_prob) is identity at inference time;
    # training-mode dropout (RNG mask) is not implemented here.
    return out


# ---------------------------------------------------------------------------
# Parameter init (deterministic, synthetic) + pure-JAX reference
# ---------------------------------------------------------------------------
def init_params(key, cfg, table_dtype=jnp.bfloat16):
    kw, kp, kt, kg, kb = jax.random.split(key, 5)
    H = cfg['hidden_size']
    word = 0.02 * jax.random.normal(kw, (cfg['vocab_size'], H), jnp.float32)
    word = word.at[cfg['pad_token_id']].set(0.0)          # padding_idx row = 0
    pos = 0.02 * jax.random.normal(kp, (cfg['max_position_embeddings'], H),
                                   jnp.float32)
    tok = 0.02 * jax.random.normal(kt, (cfg['type_vocab_size'], H), jnp.float32)
    gamma = 1.0 + 0.05 * jax.random.normal(kg, (H,), jnp.float32)
    beta = 0.05 * jax.random.normal(kb, (H,), jnp.float32)
    return dict(word_embeddings=word.astype(table_dtype),
                position_embeddings=pos.astype(table_dtype),
                token_type_embeddings=tok.astype(table_dtype),
                ln_gamma=gamma, ln_beta=beta)


def bert_embeddings_reference(params, input_ids, token_type_ids,
                              past_key_values_length=0, eps=1e-12):
    S = input_ids.shape[1]
    w = params['word_embeddings'].astype(jnp.float32)[input_ids]
    t = params['token_type_embeddings'].astype(jnp.float32)[token_type_ids]
    p = params['position_embeddings'].astype(jnp.float32)[
        past_key_values_length:past_key_values_length + S][None, :, :]
    e = w + t + p
    mu = jnp.mean(e, axis=-1, keepdims=True)
    var = jnp.mean((e - mu) ** 2, axis=-1, keepdims=True)
    return (e - mu) / jnp.sqrt(var + eps) * params['ln_gamma'] + params['ln_beta']


if __name__ == "__main__":
    cfg = dict(vocab_size=512, hidden_size=128, max_position_embeddings=64,
               type_vocab_size=2, pad_token_id=0, layer_norm_eps=1e-12,
               hidden_dropout_prob=0.1)

    key = jax.random.PRNGKey(0)
    kparams, kids, ktok = jax.random.split(key, 3)
    params = init_params(kparams, cfg)

    B, S = 2, 8
    input_ids = jax.random.randint(kids, (B, S), 0, cfg['vocab_size'],
                                   dtype=jnp.int32)
    token_type_ids = jax.random.randint(ktok, (B, S), 0, cfg['type_vocab_size'],
                                        dtype=jnp.int32)

    out = bert_embeddings_forward(params, input_ids, token_type_ids,
                                  past_key_values_length=0,
                                  eps=cfg['layer_norm_eps'])
    out = jax.block_until_ready(out)

    ref = bert_embeddings_reference(params, input_ids, token_type_ids,
                                    0, cfg['layer_norm_eps'])
    assert out.shape == (B, S, cfg['hidden_size'])
    err = float(jnp.max(jnp.abs(out.astype(jnp.float32) - ref)))
    assert err < 5e-2, f"mismatch vs reference (max abs err {err})"
    print("KERNEL_OK")
</pallas_src>

<mosaic_0001>
module attributes {stable_mosaic.version = 11 : i64} {
  func.func @_emb_ln_kernel(%arg0: i32, %arg1: i32, %arg2: memref<1x8x128xbf16, #tpu.memory_space<vmem>>, %arg3: memref<1x8x1xi32, #tpu.memory_space<vmem>>, %arg4: memref<8x128xbf16, #tpu.memory_space<vmem>>, %arg5: memref<2x128xbf16, #tpu.memory_space<vmem>>, %arg6: memref<1x128xf32, #tpu.memory_space<vmem>>, %arg7: memref<1x128xf32, #tpu.memory_space<vmem>>, %arg8: memref<1x8x128xbf16, #tpu.memory_space<vmem>>) attributes {dimension_semantics = [#tpu.dimension_semantics<parallel>, #tpu.dimension_semantics<parallel>], iteration_bounds = array<i64: 1, 2>, scalar_prefetch = 0 : i64, scratch_operands = 0 : i64, tpu.core_type = #tpu.core_type<tc>, window_params = [{transform_indices = @transform_0, window_bounds = array<i64: 1, 8, 128>}, {transform_indices = @transform_1, window_bounds = array<i64: 1, 8, 1>}, {transform_indices = @transform_2, window_bounds = array<i64: 8, 128>}, {pipeline_mode = #tpu.pipeline_mode<synchronous>, transform_indices = @transform_3, window_bounds = array<i64: 2, 128>}, {pipeline_mode = #tpu.pipeline_mode<synchronous>, transform_indices = @transform_4, window_bounds = array<i64: 1, 128>}, {pipeline_mode = #tpu.pipeline_mode<synchronous>, transform_indices = @transform_5, window_bounds = array<i64: 1, 128>}, {transform_indices = @transform_6, window_bounds = array<i64: 1, 8, 128>}]} {
    %c0 = arith.constant 0 : index
    %c0_0 = arith.constant 0 : index
    %c0_1 = arith.constant 0 : index
    %0 = vector.load %arg2[%c0, %c0_0, %c0_1] : memref<1x8x128xbf16, #tpu.memory_space<vmem>>, vector<1x8x128xbf16>
    %1 = arith.extf %0 : vector<1x8x128xbf16> to vector<1x8x128xf32>
    %c0_2 = arith.constant 0 : index
    %c0_3 = arith.constant 0 : index
    %2 = vector.load %arg4[%c0_2, %c0_3] : memref<8x128xbf16, #tpu.memory_space<vmem>>, vector<8x128xbf16>
    %3 = arith.extf %2 : vector<8x128xbf16> to vector<8x128xf32>
    %4 = vector.shape_cast %3 : vector<8x128xf32> to vector<1x8x128xf32>
    %5 = arith.addf %1, %4 : vector<1x8x128xf32>
    %c0_4 = arith.constant 0 : index
    %c0_5 = arith.constant 0 : index
    %c0_6 = arith.constant 0 : index
    %6 = vector.load %arg3[%c0_4, %c0_5, %c0_6] : memref<1x8x1xi32, #tpu.memory_space<vmem>>, vector<1x8x1xi32>
    %c0_7 = arith.constant 0 : index
    %c0_8 = arith.constant 0 : index
    %7 = vector.load %arg5[%c0_7, %c0_8] : memref<2x128xbf16, #tpu.memory_space<vmem>>, vector<2x128xbf16>
    %8 = arith.extf %7 : vector<2x128xbf16> to vector<2x128xf32>
    %c0_i32 = arith.constant 0 : i32
    %9 = vector.broadcast %c0_i32 : i32 to vector<1x8x1xi32>
    %10 = arith.cmpi eq, %6, %9 : vector<1x8x1xi32>
    %11 = arith.extui %10 : vector<1x8x1xi1> to vector<1x8x1xi32>
    %12 = arith.sitofp %11 : vector<1x8x1xi32> to vector<1x8x1xf32>
    %13 = vector.extract_strided_slice %8 {offsets = [0, 0], sizes = [1, 128], strides = [1, 1]} : vector<2x128xf32> to vector<1x128xf32>
    %14 = vector.shape_cast %13 : vector<1x128xf32> to vector<128xf32>
    %15 = vector.shape_cast %14 : vector<128xf32> to vector<1x1x128xf32>
    %16 = vector.broadcast %12 : vector<1x8x1xf32> to vector<1x8x128xf32>
    %17 = vector.broadcast %15 : vector<1x1x128xf32> to vector<1x8x128xf32>
    %18 = arith.mulf %16, %17 : vector<1x8x128xf32>
    %19 = arith.addf %5, %18 : vector<1x8x128xf32>
    %c1_i32 = arith.constant 1 : i32
    %20 = vector.broadcast %c1_i32 : i32 to vector<1x8x1xi32>
    %21 = arith.cmpi eq, %6, %20 : vector<1x8x1xi32>
    %22 = arith.extui %21 : vector<1x8x1xi1> to vector<1x8x1xi32>
    %23 = arith.sitofp %22 : vector<1x8x1xi32> to vector<1x8x1xf32>
    %24 = vector.extract_strided_slice %8 {offsets = [1, 0], sizes = [1, 128], strides = [1, 1]} : vector<2x128xf32> to vector<1x128xf32>
    %25 = vector.shape_cast %24 : vector<1x128xf32> to vector<128xf32>
    %26 = vector.shape_cast %25 : vector<128xf32> to vector<1x1x128xf32>
    %27 = vector.broadcast %23 : vector<1x8x1xf32> to vector<1x8x128xf32>
    %28 = vector.broadcast %26 : vector<1x1x128xf32> to vector<1x8x128xf32>
    %29 = arith.mulf %27, %28 : vector<1x8x128xf32>
    %30 = arith.addf %19, %29 : vector<1x8x128xf32>
    %cst = arith.constant dense<0.000000e+00> : vector<1x8xf32>
    %31 = vector.multi_reduction <add>, %30, %cst [2] : vector<1x8x128xf32> to vector<1x8xf32>
    %32 = vector.shape_cast %31 : vector<1x8xf32> to vector<1x8x1xf32>
    %cst_9 = arith.constant 1.280000e+02 : f32
    %33 = vector.broadcast %cst_9 : f32 to vector<1x8x1xf32>
    %34 = arith.divf %32, %33 : vector<1x8x1xf32>
    %35 = arith.mulf %30, %30 : vector<1x8x128xf32>
    %cst_10 = arith.constant dense<0.000000e+00> : vector<1x8xf32>
    %36 = vector.multi_reduction <add>, %35, %cst_10 [2] : vector<1x8x128xf32> to vector<1x8xf32>
    %37 = vector.shape_cast %36 : vector<1x8xf32> to vector<1x8x1xf32>
    %cst_11 = arith.constant 1.280000e+02 : f32
    %38 = vector.broadcast %cst_11 : f32 to vector<1x8x1xf32>
    %39 = arith.divf %37, %38 : vector<1x8x1xf32>
    %40 = arith.mulf %34, %34 : vector<1x8x1xf32>
    %41 = arith.subf %39, %40 : vector<1x8x1xf32>
    %cst_12 = arith.constant 9.99999996E-13 : f32
    %42 = vector.broadcast %cst_12 : f32 to vector<1x8x1xf32>
    %43 = arith.addf %41, %42 : vector<1x8x1xf32>
    %44 = math.rsqrt %43 : vector<1x8x1xf32>
    %45 = vector.broadcast %34 : vector<1x8x1xf32> to vector<1x8x128xf32>
    %46 = arith.subf %30, %45 : vector<1x8x128xf32>
    %47 = vector.broadcast %44 : vector<1x8x1xf32> to vector<1x8x128xf32>
    %48 = arith.mulf %46, %47 : vector<1x8x128xf32>
    %c0_13 = arith.constant 0 : index
    %c0_14 = arith.constant 0 : index
    %49 = vector.load %arg6[%c0_13, %c0_14] : memref<1x128xf32, #tpu.memory_space<vmem>>, vector<1x128xf32>
    %50 = vector.shape_cast %49 : vector<1x128xf32> to vector<1x1x128xf32>
    %51 = vector.broadcast %50 : vector<1x1x128xf32> to vector<1x8x128xf32>
    %52 = arith.mulf %48, %51 : vector<1x8x128xf32>
    %c0_15 = arith.constant 0 : index
    %c0_16 = arith.constant 0 : index
    %53 = vector.load %arg7[%c0_15, %c0_16] : memref<1x128xf32, #tpu.memory_space<vmem>>, vector<1x128xf32>
    %54 = vector.shape_cast %53 : vector<1x128xf32> to vector<1x1x128xf32>
    %55 = vector.broadcast %54 : vector<1x1x128xf32> to vector<1x8x128xf32>
    %56 = arith.addf %52, %55 : vector<1x8x128xf32>
    %57 = arith.truncf %56 : vector<1x8x128xf32> to vector<1x8x128xbf16>
    %c0_17 = arith.constant 0 : index
    %c0_18 = arith.constant 0 : index
    %c0_19 = arith.constant 0 : index
    %58 = vector.load %arg8[%c0_17, %c0_18, %c0_19] : memref<1x8x128xbf16, #tpu.memory_space<vmem>>, vector<1x8x128xbf16>
    tpu.vector_store %arg8[%c0_17, %c0_18, %c0_19], %57 {strides = array<i32>} : memref<1x8x128xbf16, #tpu.memory_space<vmem>>, vector<1x8x128xbf16>,
    return
  }
  func.func @transform_0(%arg0: i32, %arg1: i32) -> (i32, i32, i32) {
    %c0_i32 = arith.constant 0 : i32
    %c0_i32_0 = arith.constant 0 : i32
    return %arg1, %arg0, %c0_i32 : i32, i32, i32
  }
  func.func @transform_1(%arg0: i32, %arg1: i32) -> (i32, i32, i32) {
    %c0_i32 = arith.constant 0 : i32
    %c0_i32_0 = arith.constant 0 : i32
    return %arg1, %arg0, %c0_i32 : i32, i32, i32
  }
  func.func @transform_2(%arg0: i32, %arg1: i32) -> (i32, i32) {
    %c0_i32 = arith.constant 0 : i32
    %c0_i32_0 = arith.constant 0 : i32
    return %arg0, %c0_i32 : i32, i32
  }
  func.func @transform_3(%arg0: i32, %arg1: i32) -> (i32, i32) {
    %c0_i32 = arith.constant 0 : i32
    %c0_i32_0 = arith.constant 0 : i32
    %c0_i32_1 = arith.constant 0 : i32
    return %c0_i32, %c0_i32_0 : i32, i32
  }
  func.func @transform_4(%arg0: i32, %arg1: i32) -> (i32, i32) {
    %c0_i32 = arith.constant 0 : i32
    %c0_i32_0 = arith.constant 0 : i32
    %c0_i32_1 = arith.constant 0 : i32
    return %c0_i32, %c0_i32_0 : i32, i32
  }
  func.func @transform_5(%arg0: i32, %arg1: i32) -> (i32, i32) {
    %c0_i32 = arith.constant 0 : i32
    %c0_i32_0 = arith.constant 0 : i32
    %c0_i32_1 = arith.constant 0 : i32
    return %c0_i32, %c0_i32_0 : i32, i32
  }
  func.func @transform_6(%arg0: i32, %arg1: i32) -> (i32, i32, i32) {
    %c0_i32 = arith.constant 0 : i32
    %c0_i32_0 = arith.constant 0 : i32
    return %arg1, %arg0, %c0_i32 : i32, i32, i32
  }
}

</mosaic_0001>

<llo_original>
// kernel: tpu_custom_call.1
$region0: #{tpu_custom_call.1}
  #allocation0 [shape = 'u32[]', space=smem, size = 0x4, offset = 0x4, fixed_abs, tag = 'smem constant byte address 0x4 - core index']
  #allocation1 [shape = 'u32[72,128]{1,0:T(1,128)}', space=vmem, size = 0x9000, scoped, tag = 'internal scratch']
  %s0 = inlined_call_operand.vmem [shape: bf16[2,8,128], index: 0, kind: input, shape index: {}]
  %s1 = inlined_call_operand.vmem [shape: s32[2,8,1], index: 1, kind: input, shape index: {}]
  %s2 = inlined_call_operand.vmem [shape: bf16[8,128], index: 2, kind: input, shape index: {}]
  %s3 = inlined_call_operand.vmem [shape: bf16[2,128], index: 3, kind: input, shape index: {}]
  %s4 = inlined_call_operand.vmem [shape: f32[1,128], index: 4, kind: input, shape index: {}]
  %s5 = inlined_call_operand.vmem [shape: f32[1,128], index: 5, kind: input, shape index: {}]
  %s6 = inlined_call_operand.hbm [shape: bf16[2,8,128], index: 6, kind: output, shape index: {}]
  %s7 = sld [smem:[#allocation0]]
  $region57: #{tpu_custom_call.1} parent=0
    _
  %s9 = ssub.s32 1, %s7
  %s10 = scalar_select 0, %s9, %s7
  $region1: #{tpu_custom_call.1} parent=0
    #allocation2 [shape = 'u8[4096]{0}', space=vmem, size = 0x1000, scoped, tag = 'output window, operand 0']
    #allocation3 [shape = 's32[2]{0}', space=sflag, size = 0x8, scoped, tag = 'scoped memory for tpu_custom_call.1']
    %11 = vsyncpa [#allocation3], 0
    %s12 = scalar_lea.sflag [#allocation3], 1
    %13 = vsyncpa %s12, 0
    loop: start=0, step=1, limit=4
    $region2: #{tpu_custom_call.1} parent=1 // loop_pre_header
      _
    $region3: #{tpu_custom_call.1} parent=1 // loop_header
      %s15 = sphi 0, %s19
      %p16 = scmp.ge.s32.totalorder %s15, 4
      %s22 = sphi 0, %s34
      %s23 = sphi 0, %s30
      %s24 = sphi 0, %s22
      %s25 = sphi 0, %s23
      %s26 = sphi 0, %s24
      %s27 = sphi 0, %s25
      %s39 = sphi 0, %s41
      %s42 = sphi 0, %s39
      %s43 = sphi 0, %s42
      %s59 = sphi 0, %s43
      %s67 = sphi 0, %s69
      %s70 = sphi 0, %s67
      %s71 = sphi 0, %s70
      %s87 = sphi 0, %s71
      %s93 = sphi 0, %s95
      %s96 = sphi 0, %s93
      %s97 = sphi 0, %s96
      %s113 = sphi 0, %s97
      %s117 = sphi 0, %s117
      %s119 = sphi 0, %s117
      %s120 = sphi 0, %s119
      %s134 = sphi 0, %s120
      %s138 = sphi 0, %s138
      %s140 = sphi 0, %s138
      %s141 = sphi 0, %s140
      %s155 = sphi 0, %s141
      %s159 = sphi 0, %s159
      %s161 = sphi 0, %s159
      %s162 = sphi 0, %s161
      %s176 = sphi 0, %s162
      %s184 = sphi 0, %s186
      %s187 = sphi 0, %s184
      %s188 = sphi 0, %s187
      %s204 = sphi 0, %s188
    $region4: #{tpu_custom_call.1} parent=1 // loop_header_branch
      %18 = sbr.rel (%p16) target = $region8
    $region5: #{tpu_custom_call.1} parent=1 // loop_body
      %s20 = ssub.s32 %s15, 1
      %s21 = ssub.s32 %s15, 2
      %s28 = sadd.s32 1, %s23
      %p29 = scmp.ge.s32.totalorder %s28, 2
      %s30 = scalar_select %p29, 0, %s28
      %s31 = sadd.s32 1, %s22
      %s32 = scalar_select %p29, %s31, %s22
      %p33 = scmp.ge.s32.totalorder %s32, 1
      %s34 = scalar_select %p33, 0, %s32
      %s35 = ssub.s32 %s23, %s30
      %s36 = ssub.s32 %s22, %s34
      %s37 = sor.u32 %s35, %s36
      %p38 = scmp.eq.s32.totalorder %s37, 0
      %s40 = sadd.s32 %s39, 1
      %s41 = scalar_select %p38, %s39, %s40
      %p44 = pneg %p38
      %p45 = scmp.eq.s32.totalorder %s15, 1
      %p46 = por %p44, %p45
      %p47 = scmp.ne.s32.totalorder %s39, %s42
      %p48 = scmp.eq.s32.totalorder %s15, 0
      %p49 = por %p47, %p48
      %p50 = scmp.ne.s32.totalorder %s39, %s42
      %p51 = scmp.eq.s32.totalorder %s20, 1
      %p52 = por %p50, %p51
      %p53 = scmp.ne.s32.totalorder %s42, %s43
      %p54 = scmp.eq.s32.totalorder %s20, 0
      %p55 = por %p53, %p54
      %p56 = scmp.ne.s32.totalorder %s42, %s43
      %p57 = scmp.eq.s32.totalorder %s21, 1
      %p58 = por %p56, %p57
      %p60 = scmp.ne.s32.totalorder %s43, %s59
      %p61 = scmp.eq.s32.totalorder %s21, 0
      %p62 = por %p60, %p61
      %s63 = ssub.s32 %s23, %s30
      %s64 = ssub.s32 %s22, %s34
      %s65 = sor.u32 %s63, %s64
      %p66 = scmp.eq.s32.totalorder %s65, 0
      %s68 = sadd.s32 %s67, 1
      %s69 = scalar_select %p66, %s67, %s68
      %p72 = pneg %p66
      %p73 = scmp.eq.s32.totalorder %s15, 1
      %p74 = por %p72, %p73
      %p75 = scmp.ne.s32.totalorder %s67, %s70
      %p76 = scmp.eq.s32.totalorder %s15, 0
      %p77 = por %p75, %p76
      %p78 = scmp.ne.s32.totalorder %s67, %s70
      %p79 = scmp.eq.s32.totalorder %s20, 1
      %p80 = por %p78, %p79
      %p81 = scmp.ne.s32.totalorder %s70, %s71
      %p82 = scmp.eq.s32.totalorder %s20, 0
      %p83 = por %p81, %p82
      %p84 = scmp.ne.s32.totalorder %s70, %s71
      %p85 = scmp.eq.s32.totalorder %s21, 1
      %p86 = por %p84, %p85
      %p88 = scmp.ne.s32.totalorder %s71, %s87
      %p89 = scmp.eq.s32.totalorder %s21, 0
      %p90 = por %p88, %p89
      %s91 = ssub.s32 %s22, %s34
      %p92 = scmp.eq.s32.totalorder %s91, 0
      %s94 = sadd.s32 %s93, 1
      %s95 = scalar_select %p92, %s93, %s94
      %p98 = pneg %p92
      %p99 = scmp.eq.s32.totalorder %s15, 1
      %p100 = por %p98, %p99
      %p101 = scmp.ne.s32.totalorder %s93, %s96
      %p102 = scmp.eq.s32.totalorder %s15, 0
      %p103 = por %p101, %p102
      %p104 = scmp.ne.s32.totalorder %s93, %s96
      %p105 = scmp.eq.s32.totalorder %s20, 1
      %p106 = por %p104, %p105
      %p107 = scmp.ne.s32.totalorder %s96, %s97
      %p108 = scmp.eq.s32.totalorder %s20, 0
      %p109 = por %p107, %p108
      %p110 = scmp.ne.s32.totalorder %s96, %s97
      %p111 = scmp.eq.s32.totalorder %s21, 1
      %p112 = por %p110, %p111
      %p114 = scmp.ne.s32.totalorder %s97, %s113
      %p115 = scmp.eq.s32.totalorder %s21, 0
      %p116 = por %p114, %p115
      %s118 = sadd.s32 %s117, 1
      %p121 = scmp.eq.s32.totalorder %s15, 1
      %p122 = scmp.ne.s32.totalorder %s117, %s119
      %p123 = scmp.eq.s32.totalorder %s15, 0
      %p124 = por %p122, %p123
      %p125 = scmp.ne.s32.totalorder %s117, %s119
      %p126 = scmp.eq.s32.totalorder %s20, 1
      %p127 = por %p125, %p126
      %p128 = scmp.ne.s32.totalorder %s119, %s120
      %p129 = scmp.eq.s32.totalorder %s20, 0
      %p130 = por %p128, %p129
      %p131 = scmp.ne.s32.totalorder %s119, %s120
      %p132 = scmp.eq.s32.totalorder %s21, 1
      %p133 = por %p131, %p132
      %p135 = scmp.ne.s32.totalorder %s120, %s134
      %p136 = scmp.eq.s32.totalorder %s21, 0
      %p137 = por %p135, %p136
      %s139 = sadd.s32 %s138, 1
      %p142 = scmp.eq.s32.totalorder %s15, 1
      %p143 = scmp.ne.s32.totalorder %s138, %s140
      %p144 = scmp.eq.s32.totalorder %s15, 0
      %p145 = por %p143, %p144
      %p146 = scmp.ne.s32.totalorder %s138, %s140
      %p147 = scmp.eq.s32.totalorder %s20, 1
      %p148 = por %p146, %p147
      %p149 = scmp.ne.s32.totalorder %s140, %s141
      %p150 = scmp.eq.s32.totalorder %s20, 0
      %p151 = por %p149, %p150
      %p152 = scmp.ne.s32.totalorder %s140, %s141
      %p153 = scmp.eq.s32.totalorder %s21, 1
      %p154 = por %p152, %p153
      %p156 = scmp.ne.s32.totalorder %s141, %s155
      %p157 = scmp.eq.s32.totalorder %s21, 0
      %p158 = por %p156, %p157
      %s160 = sadd.s32 %s159, 1
      %p163 = scmp.eq.s32.totalorder %s15, 1
      %p164 = scmp.ne.s32.totalorder %s159, %s161
      %p165 = scmp.eq.s32.totalorder %s15, 0
      %p166 = por %p164, %p165
      %p167 = scmp.ne.s32.totalorder %s159, %s161
      %p168 = scmp.eq.s32.totalorder %s20, 1
      %p169 = por %p167, %p168
      %p170 = scmp.ne.s32.totalorder %s161, %s162
      %p171 = scmp.eq.s32.totalorder %s20, 0
      %p172 = por %p170, %p171
      %p173 = scmp.ne.s32.totalorder %s161, %s162
      %p174 = scmp.eq.s32.totalorder %s21, 1
      %p175 = por %p173, %p174
      %p177 = scmp.ne.s32.totalorder %s162, %s176
      %p178 = scmp.eq.s32.totalorder %s21, 0
      %p179 = por %p177, %p178
      %s180 = ssub.s32 %s23, %s30
      %s181 = ssub.s32 %s22, %s34
      %s182 = sor.u32 %s180, %s181
      %p183 = scmp.eq.s32.totalorder %s182, 0
      %s185 = sadd.s32 %s184, 1
      %s186 = scalar_select %p183, %s184, %s185
      %p189 = pneg %p183
      %p190 = scmp.eq.s32.totalorder %s15, 1
      %p191 = por %p189, %p190
      %p192 = scmp.ne.s32.totalorder %s184, %s187
      %p193 = scmp.eq.s32.totalorder %s15, 0
      %p194 = por %p192, %p193
      %p195 = scmp.ne.s32.totalorder %s184, %s187
      %p196 = scmp.eq.s32.totalorder %s20, 1
      %p197 = por %p195, %p196
      %p198 = scmp.ne.s32.totalorder %s187, %s188
      %p199 = scmp.eq.s32.totalorder %s20, 0
      %p200 = por %p198, %p199
      %p201 = scmp.ne.s32.totalorder %s187, %s188
      %p202 = scmp.eq.s32.totalorder %s21, 1
      %p203 = por %p201, %p202
      %p205 = scmp.ne.s32.totalorder %s188, %s204
      %p206 = scmp.eq.s32.totalorder %s21, 0
      %p207 = por %p205, %p206
      %p208 = scmp.le.s32.totalorder 1, %s15
      %p209 = scmp.lt.s32.totalorder %s15, 3
      %p210 = pnand %p208, %p209
      %p211 = pneg %p210
      // Predicated region
      $region9: #{tpu_custom_call.1} parent=5 // pred_check
        _
      $region10: #{tpu_custom_call.1} parent=5 // pred_check_branch
        %213 = sbr.rel (%p210) target = $region12
      $region11: #{tpu_custom_call.1} parent=5 // pred_region
        %s214 = ssub.s32 %s15, 1
        // Predicated region
        $region13: #{tpu_custom_call.1} parent=11 // pred_check
          %p215 = pneg %p109
        $region14: #{tpu_custom_call.1} parent=11 // pred_check_branch
          %217 = sbr.rel (%p215) target = $region16
        $region15: #{tpu_custom_call.1} parent=11 // pred_region
          %p218 = scmp.lt.s32.totalorder %s24, 0
          %s219 = scalar_select %p218, %s24, 0
          %s220 = smul.addr %s219, 4
          %s221 = scalar_lea.vmem %s2, %s220
        $region16: #{tpu_custom_call.1} parent=11 // pred_fallthru
          _
        // Predicated region
        $region17: #{tpu_custom_call.1} parent=11 // pred_check
          %p222 = pneg %p130
        $region18: #{tpu_custom_call.1} parent=11 // pred_check_branch
          %224 = sbr.rel (%p222) target = $region20
        $region19: #{tpu_custom_call.1} parent=11 // pred_region
          _
        $region20: #{tpu_custom_call.1} parent=11 // pred_fallthru
          _
        // Predicated region
        $region21: #{tpu_custom_call.1} parent=11 // pred_check
          %p225 = pneg %p151
        $region22: #{tpu_custom_call.1} parent=11 // pred_check_branch
          %227 = sbr.rel (%p225) target = $region24
        $region23: #{tpu_custom_call.1} parent=11 // pred_region
          _
        $region24: #{tpu_custom_call.1} parent=11 // pred_fallthru
          _
        // Predicated region
        $region25: #{tpu_custom_call.1} parent=11 // pred_check
          %p228 = pneg %p172
        $region26: #{tpu_custom_call.1} parent=11 // pred_check_branch
          %230 = sbr.rel (%p228) target = $region28
        $region27: #{tpu_custom_call.1} parent=11 // pred_region
          _
        $region28: #{tpu_custom_call.1} parent=11 // pred_fallthru
          _
      $region12: #{tpu_custom_call.1} parent=5 // pred_fallthru
        _
      %p231 = scmp.lt.s32.totalorder %s15, 2
      // Predicated region
      $region29: #{tpu_custom_call.1} parent=5 // pred_check
        %p232 = pneg %p231
      $region30: #{tpu_custom_call.1} parent=5 // pred_check_branch
        %234 = sbr.rel (%p232) target = $region32
      $region31: #{tpu_custom_call.1} parent=5 // pred_region
        // Predicated region
        $region33: #{tpu_custom_call.1} parent=31 // pred_check
          %p235 = pneg %p49
        $region34: #{tpu_custom_call.1} parent=31 // pred_check_branch
          %237 = sbr.rel (%p235) target = $region36
        $region35: #{tpu_custom_call.1} parent=31 // pred_region
          %p238 = scmp.lt.s32.totalorder %s23, 1
          %s239 = scalar_select %p238, %s23, 1
          %p240 = scmp.lt.s32.totalorder %s22, 0
          %s241 = scalar_select %p240, %s22, 0
          %s242 = sadd.s32 %s241, %s239
          %s243 = smul.addr %s242, 4
          %s244 = scalar_lea.vmem %s0, %s243
        $region36: #{tpu_custom_call.1} parent=31 // pred_fallthru
          _
        // Predicated region
        $region37: #{tpu_custom_call.1} parent=31 // pred_check
          %p245 = pneg %p77
        $region38: #{tpu_custom_call.1} parent=31 // pred_check_branch
          %247 = sbr.rel (%p245) target = $region40
        $region39: #{tpu_custom_call.1} parent=31 // pred_region
          %p248 = scmp.lt.s32.totalorder %s23, 1
          %s249 = scalar_select %p248, %s23, 1
          %p250 = scmp.lt.s32.totalorder %s22, 0
          %s251 = scalar_select %p250, %s22, 0
          %s252 = sadd.s32 %s251, %s249
          %s253 = smul.addr %s252, 8
          %s254 = scalar_lea.vmem %s1, %s253
        $region40: #{tpu_custom_call.1} parent=31 // pred_fallthru
          _
      $region32: #{tpu_custom_call.1} parent=5 // pred_fallthru
        _
      %p255 = scmp.le.s32.totalorder 1, %s15
      %p256 = scmp.lt.s32.totalorder %s15, 3
      %p257 = pnand %p255, %p256
      %p258 = pneg %p257
      // Predicated region
      $region41: #{tpu_custom_call.1} parent=5 // pred_check
        _
      $region42: #{tpu_custom_call.1} parent=5 // pred_check_branch
        %260 = sbr.rel (%p257) target = $region44
      $region43: #{tpu_custom_call.1} parent=5 // pred_region
        %s261 = ssub.s32 %s15, 1
        %p262 = scmp.lt.s32.totalorder %s25, 1
        %s263 = scalar_select %p262, %s25, 1
        %p264 = scmp.lt.s32.totalorder %s24, 0
        %s265 = scalar_select %p264, %s24, 0
        %s266 = sadd.s32 %s265, %s263
        %s267 = smul.addr %s266, 4
        %s268 = scalar_lea.vmem %s0, %s267
        %p269 = pneg %p55
        %p270 = pneg %p52
        %p271 = scmp.lt.s32.totalorder %s25, 1
        %s272 = scalar_select %p271, %s25, 1
        %p273 = scmp.lt.s32.totalorder %s24, 0
        %s274 = scalar_select %p273, %s24, 0
        %s275 = sadd.s32 %s274, %s272
        %s276 = smul.addr %s275, 8
        %s277 = scalar_lea.vmem %s1, %s276
        %p278 = pneg %p83
        %p279 = pneg %p80
        %p280 = scmp.lt.s32.totalorder %s24, 0
        %s281 = scalar_select %p280, %s24, 0
        %s282 = smul.addr %s281, 4
        %s283 = scalar_lea.vmem %s2, %s282
        %p284 = pneg %p109
        %p285 = pneg %p106
        %p286 = pneg %p130
        %p287 = pneg %p127
        %p288 = pneg %p151
        %p289 = pneg %p148
        %p290 = pneg %p172
        %p291 = pneg %p169
        %p292 = pneg %p200
        %p293 = pneg %p197
        %s294 = sand.u32 %s187, 1
        %s295 = scalar_lea.sflag [#allocation3], %s294
        %s296 = sand.u32 %s187, 1
        %s297 = smul.addr %s296, 4
        %s298 = scalar_lea.vmem [#allocation2], %s297
        %p299 = scmp.lt.s32.totalorder %s25, 1
        %s300 = scalar_select %p299, %s25, 1
        %p301 = scmp.lt.s32.totalorder %s24, 0
        %s302 = scalar_select %p301, %s24, 0
        %s303 = sadd.s32 %s302, %s300
        %s304 = smul.addr %s303, 4
        %s305 = scalar_lea.vmem %s0, %s304
        %p306 = scmp.lt.s32.totalorder %s25, 1
        %s307 = scalar_select %p306, %s25, 1
        %p308 = scmp.lt.s32.totalorder %s24, 0
        %s309 = scalar_select %p308, %s24, 0
        %s310 = sadd.s32 %s309, %s307
        %s311 = smul.addr %s310, 8
        %s312 = scalar_lea.vmem %s1, %s311
        %p313 = scmp.lt.s32.totalorder %s24, 0
        %s314 = scalar_select %p313, %s24, 0
        %s315 = smul.addr %s314, 4
        %s316 = scalar_lea.vmem %s2, %s315
        %v317 = vld [vmem:[%s305] sm:$0xf]
        %v318 = vunpack.c.l.bf16 %v317
        %v319 = vld [vmem:[%s316] sm:$0xf]
        %v320 = vunpack.c.l.bf16 %v319
        %v321 = vadd.f32 %v318, %v320
        %v322 = vld [vmem:[%s312] sm:$0xff]
        %v323 = vld [vmem:[%s3] sm:$0x1]
        %v324 = vunpack.c.l.bf16 %v323
        %vm325 = vcmp.eq.s32.totalorder %v322, 0
        %v326 = vsel %vm325, 1, 0
        %v327 = vcvt.s32.f32 %v326
        %329 = vset.pattern.permute.xlu0 0
        %330 = vperm.xlu0 %329, %v327
        %v331 = vpop.permute.xlu0 %330
        %v333 = vperm.slane %v324, 0
        %v334 = vmul.f32 %v331, %v333
        %v335 = vadd.f32 %v321, %v334
        %vm336 = vcmp.eq.s32.totalorder %v322, 1
        %v337 = vsel %vm336, 1, 0
        %v338 = vcvt.s32.f32 %v337
        %340 = vset.pattern.permute.xlu0 0
        %341 = vperm.xlu0 %340, %v338
        %v342 = vpop.permute.xlu0 %341
        %v344 = vperm.slane %v324, 1
        %v345 = vmul.f32 %v342, %v344
        %v346 = vadd.f32 %v335, %v345
        %347 = vadd.xlane.f32.xlu0 %v346
        %v348 = vpop.xlane.xlu0 %347
        %v349 = vrcp.pop 128.0
        %v350 = vmul.f32 128.0, %v349
        %v351 = vsub.f32 1.0, %v350
        %v352 = vmul.f32 %v349, %v351
        %v353 = vadd.f32 %v349, %v352
        %vm354 = vweird.f32 %v349
        %v355 = vsel %vm354, %v349, %v353
        %v356 = vmul.f32 %v348, %v355
        %v357 = vmul.f32 %v346, %v346
        %358 = vadd.xlane.f32.xlu0 %v357
        %v359 = vpop.xlane.xlu0 %358
        %v360 = vmul.f32 %v359, %v355
        %v361 = vmul.f32 %v356, %v356
        %v362 = vsub.f32 %v360, %v361
        %v363 = vadd.f32 %v362, 1e-12
        %v364 = vrsqrt.pop %v363
        %v365 = vmul.f32 %v364, %v363
        %v366 = vmul.f32 %v365, %v364
        %v367 = vmul.f32 0.5, %v366
        %v368 = vsub.f32 1.5, %v367
        %v369 = vmul.f32 %v364, %v368
        %vm370 = vweird.f32 %v363
        %vm371 = vweird.f32 %v364
        %vm372 = vmor %vm370, %vm371
        %v373 = vsel %vm372, %v364, %v369
        %v374 = vsub.f32 %v346, %v356
        %v375 = vmul.f32 %v374, %v373
        %v376 = vld [vmem:[%s4] sm:$0x1]
        %v378 = vperm.slane %v376, 0
        %v380 = vmul.f32 %v375, %v378
        %v381 = vld [vmem:[%s5] sm:$0x1]
        %v383 = vperm.slane %v381, 0
        %v385 = vadd.f32 %v380, %v383
        %v386 = vpack.c.bf16 %v385, %v385
        %387 = vst [vmem:[%s298] sm:$0xf] %v386
        %s388 = sand.u32 %s187, 1
        %s389 = scalar_lea.sflag [#allocation3], %s388
        %s390 = sand.u32 %s187, 1
        %s391 = smul.addr %s390, 4
        %s392 = scalar_lea.vmem [#allocation2], %s391
        // Predicated region
        $region45: #{tpu_custom_call.1} parent=43 // pred_check
          %p393 = pneg %p197
        $region46: #{tpu_custom_call.1} parent=43 // pred_check_branch
          %395 = sbr.rel (%p393) target = $region48
        $region47: #{tpu_custom_call.1} parent=43 // pred_region
          %397 = vsyncadd %s389, 0
          %s398 = sadd.s32 %s24, %s25
          %s399 = smul.addr %s398, 4
          %s400 = scalar_lea.hbm %s6, %s399
          %s402 = sshll.u32 %s392, 4
          %s403 = int_to_ptr.vmem [resolvable:$true] %s402
          %s404 = sshll.u32 %s400, 4
          %s405 = int_to_ptr.hbm [resolvable:$true] %s404
          %407 = dma.vmem_to_hbm [thread:$0]  %s403, 64, %s405, %s389
        $region48: #{tpu_custom_call.1} parent=43 // pred_fallthru
          _
      $region44: #{tpu_custom_call.1} parent=5 // pred_fallthru
        _
      %p408 = scmp.le.s32.totalorder 2, %s15
      // Predicated region
      $region49: #{tpu_custom_call.1} parent=5 // pred_check
        %p409 = pneg %p408
      $region50: #{tpu_custom_call.1} parent=5 // pred_check_branch
        %411 = sbr.rel (%p409) target = $region52
      $region51: #{tpu_custom_call.1} parent=5 // pred_region
        %s412 = ssub.s32 %s15, 2
        // Predicated region
        $region53: #{tpu_custom_call.1} parent=51 // pred_check
          %p413 = pneg %p203
        $region54: #{tpu_custom_call.1} parent=51 // pred_check_branch
          %415 = sbr.rel (%p413) target = $region56
        $region55: #{tpu_custom_call.1} parent=51 // pred_region
          %s416 = sand.u32 %s188, 1
          %s417 = scalar_lea.sflag [#allocation3], %s416
          %s418 = sand.u32 %s188, 1
          %s419 = smul.addr %s418, 4
          %s420 = scalar_lea.vmem [#allocation2], %s419
          %422 = dma.done %s417, 64
        $region56: #{tpu_custom_call.1} parent=51 // pred_fallthru
          _
      $region52: #{tpu_custom_call.1} parent=5 // pred_fallthru
        _
    $region6: #{tpu_custom_call.1} parent=1 // loop_footer
      %s19 = sadd.s32 1, %s15
    $region7: #{tpu_custom_call.1} parent=1 // loop_footer_branch
      %14 = sbr.rel target = $region3
    $region8: #{tpu_custom_call.1} parent=1 // loop_exit
      _
    %423 = vsyncpa [#allocation3], 1
    %s424 = scalar_lea.sflag [#allocation3], 1
    %425 = vsyncpa %s424, 1

</llo_original>
